<compile_context>
chip_gen: v7x
topology: tpu7x:2x2x1
jax: 0.10.0
libtpu: 0.0.40
codegen_flags: <defaults>
</compile_context>

<pallas_src>
import functools
import math

import jax
import jax.numpy as jnp
from jax import lax
from jax.experimental import pallas as pl
from jax.experimental.pallas import tpu as pltpu


def _batchnorm_kernel(x_ref, g_ref, b_ref, o_ref, stat_ref, coef_ref, *,
                      m_total, eps):
    p = pl.program_id(0)          # 0 = reduction pass, 1 = normalize pass
    t = pl.program_id(1)          # row-tile index
    nt = pl.num_programs(1)

    @pl.when(p == 0)
    def _reduce():
        x = x_ref[...].astype(jnp.float32)                       # (Tm, E)

        @pl.when(t == 0)
        def _init():
            stat_ref[...] = jnp.zeros_like(stat_ref)

        stat_ref[0:1, :] += jnp.sum(x, axis=0, keepdims=True)
        stat_ref[1:2, :] += jnp.sum(x * x, axis=0, keepdims=True)

        @pl.when(t == nt - 1)
        def _finalize():
            inv_m = jnp.float32(1.0 / m_total)
            mean = stat_ref[0:1, :] * inv_m                      # (1, E)
            var = stat_ref[1:2, :] * inv_m - mean * mean         # biased var
            rstd = lax.rsqrt(var + jnp.float32(eps))             # EUP slot
            scale = g_ref[...].astype(jnp.float32) * rstd
            coef_ref[0:1, :] = scale
            coef_ref[1:2, :] = b_ref[...].astype(jnp.float32) - mean * scale

    @pl.when(p == 1)
    def _normalize():
        x = x_ref[...].astype(jnp.float32)
        y = x * coef_ref[0:1, :] + coef_ref[1:2, :]
        o_ref[...] = y.astype(o_ref.dtype)


def _choose_row_tile(m, e, dtype_bytes=4, budget_bytes=4 * 1024 * 1024):
    """Largest row tile that fits a VMEM budget, divides M, and keeps the
    (8, 128)-tiling constraint (multiple of 8, or the full dim)."""
    max_rows = max(8, budget_bytes // max(1, e * dtype_bytes))
    if m <= max_rows:
        return m                              # whole array in one block
    tile = (max_rows // 8) * 8
    while tile >= 8:
        if m % tile == 0:
            return tile
        tile -= 8
    return m                                  # fallback: single block


def normalization_batch(x, gamma, beta, aux, *, eps=1e-5):
    """Pallas equivalent of Normalization(embed_dim, 'batch').forward([x, aux])."""
    orig_shape = x.shape
    E = orig_shape[-1]
    xf = x.reshape(-1, E)
    M = xf.shape[0]

    Tm = _choose_row_tile(M, E)
    T = M // Tm if M % Tm == 0 else 1
    if T == 1:
        Tm = M

    g2 = gamma.reshape(1, E).astype(jnp.float32)
    b2 = beta.reshape(1, E).astype(jnp.float32)

    kernel = functools.partial(_batchnorm_kernel, m_total=float(M), eps=eps)

    out = pl.pallas_call(
        kernel,
        out_shape=jax.ShapeDtypeStruct((M, E), x.dtype),
        grid_spec=pltpu.PrefetchScalarGridSpec(
            num_scalar_prefetch=0,
            grid=(2, T),
            in_specs=[
                pl.BlockSpec((Tm, E), lambda p, t: (t, 0)),   # x rows
                pl.BlockSpec((1, E), lambda p, t: (0, 0)),    # gamma
                pl.BlockSpec((1, E), lambda p, t: (0, 0)),    # beta
            ],
            out_specs=pl.BlockSpec((Tm, E), lambda p, t: (t, 0)),
            scratch_shapes=[
                pltpu.VMEM((2, E), jnp.float32),   # [sum; sum of squares]
                pltpu.VMEM((2, E), jnp.float32),   # [scale; shift]
            ],
        ),
        compiler_params=pltpu.CompilerParams(
            dimension_semantics=("arbitrary", "arbitrary")),
    )(xf, g2, b2)

    return [out.reshape(orig_shape), aux]


def reference_batchnorm(x, gamma, beta, eps=1e-5):
    """Pure-JAX reference mirroring BatchNorm1d (training mode, batch stats)."""
    E = x.shape[-1]
    xf = x.reshape(-1, E).astype(jnp.float32)
    mean = jnp.mean(xf, axis=0)
    var = jnp.var(xf, axis=0)                       # biased variance
    y = (xf - mean) * lax.rsqrt(var + eps) * gamma + beta
    return y.reshape(x.shape).astype(x.dtype)


if __name__ == "__main__":
    # Small shapes consistent with the graph-encoder usage: (batch, nodes, embed_dim).
    B, N, E = 2, 8, 128

    key = jax.random.PRNGKey(0)
    kx, kg, kb, ka = jax.random.split(key, 4)

    x = jax.random.normal(kx, (B, N, E), jnp.float32)
    # init_parameters(): uniform(-1/sqrt(last_dim), 1/sqrt(last_dim))
    stdv = 1.0 / math.sqrt(E)
    gamma = jax.random.uniform(kg, (E,), jnp.float32, -stdv, stdv)
    beta = jax.random.uniform(kb, (E,), jnp.float32, -stdv, stdv)
    aux = jax.random.normal(ka, (B, N, N), jnp.float32)   # inputs[-1] passthrough

    out, aux_out = normalization_batch(x, gamma, beta, aux)
    jax.block_until_ready(out)

    ref = reference_batchnorm(x, gamma, beta)
    assert out.shape == x.shape
    assert aux_out.shape == aux.shape
    max_err = float(jnp.max(jnp.abs(out - ref)))
    assert jnp.allclose(out, ref, atol=1e-4, rtol=1e-4), max_err

    print("KERNEL_OK")
</pallas_src>

<mosaic_0001>
module attributes {stable_mosaic.version = 11 : i64} {
  func.func @_batchnorm_kernel(%arg0: i32, %arg1: i32, %arg2: memref<16x128xf32, #tpu.memory_space<vmem>>, %arg3: memref<1x128xf32, #tpu.memory_space<vmem>>, %arg4: memref<1x128xf32, #tpu.memory_space<vmem>>, %arg5: memref<16x128xf32, #tpu.memory_space<vmem>>, %arg6: memref<2x128xf32, #tpu.memory_space<vmem>>, %arg7: memref<2x128xf32, #tpu.memory_space<vmem>>) attributes {dimension_semantics = [#tpu.dimension_semantics<arbitrary>, #tpu.dimension_semantics<arbitrary>], iteration_bounds = array<i64: 2, 1>, scalar_prefetch = 0 : i64, scratch_operands = 2 : i64, tpu.core_type = #tpu.core_type<tc>, window_params = [{transform_indices = @transform_0, window_bounds = array<i64: 16, 128>}, {pipeline_mode = #tpu.pipeline_mode<synchronous>, transform_indices = @transform_1, window_bounds = array<i64: 1, 128>}, {pipeline_mode = #tpu.pipeline_mode<synchronous>, transform_indices = @transform_2, window_bounds = array<i64: 1, 128>}, {transform_indices = @transform_3, window_bounds = array<i64: 16, 128>}]} {
    %c0_i32 = arith.constant 0 : i32
    %0 = arith.cmpi eq, %arg0, %c0_i32 : i32
    %1 = arith.extui %0 : i1 to i32
    %c0_i32_0 = arith.constant 0 : i32
    %2 = arith.cmpi ne, %1, %c0_i32_0 : i32
    scf.if %2 {
      %c0 = arith.constant 0 : index
      %c0_2 = arith.constant 0 : index
      %6 = vector.load %arg2[%c0, %c0_2] : memref<16x128xf32, #tpu.memory_space<vmem>>, vector<16x128xf32>
      %c0_i32_3 = arith.constant 0 : i32
      %7 = arith.cmpi eq, %arg1, %c0_i32_3 : i32
      %8 = arith.extui %7 : i1 to i32
      %c0_i32_4 = arith.constant 0 : i32
      %9 = arith.cmpi ne, %8, %c0_i32_4 : i32
      scf.if %9 {
        %cst_15 = arith.constant 0.000000e+00 : f32
        %24 = vector.broadcast %cst_15 : f32 to vector<2x128xf32>
        %c0_16 = arith.constant 0 : index
        %c0_17 = arith.constant 0 : index
        %25 = vector.load %arg6[%c0_16, %c0_17] : memref<2x128xf32, #tpu.memory_space<vmem>>, vector<2x128xf32>
        tpu.vector_store %arg6[%c0_16, %c0_17], %24 {strides = array<i32>} : memref<2x128xf32, #tpu.memory_space<vmem>>, vector<2x128xf32>,
      } else {
      }
      %c0_5 = arith.constant 0 : index
      %c0_6 = arith.constant 0 : index
      %10 = vector.load %arg6[%c0_5, %c0_6] : memref<2x128xf32, #tpu.memory_space<vmem>>, vector<1x128xf32>
      %cst = arith.constant dense<0.000000e+00> : vector<128xf32>
      %11 = vector.multi_reduction <add>, %6, %cst [0] : vector<16x128xf32> to vector<128xf32>
      %12 = vector.shape_cast %11 : vector<128xf32> to vector<1x128xf32>
      %13 = arith.addf %10, %12 : vector<1x128xf32>
      %c0_7 = arith.constant 0 : index
      %c0_8 = arith.constant 0 : index
      %14 = vector.load %arg6[%c0_7, %c0_8] : memref<2x128xf32, #tpu.memory_space<vmem>>, vector<1x128xf32>
      tpu.vector_store %arg6[%c0_7, %c0_8], %13 {strides = array<i32>} : memref<2x128xf32, #tpu.memory_space<vmem>>, vector<1x128xf32>,
      %c1 = arith.constant 1 : index
      %c0_9 = arith.constant 0 : index
      %15 = vector.load %arg6[%c1, %c0_9] : memref<2x128xf32, #tpu.memory_space<vmem>>, vector<1x128xf32>
      %16 = arith.mulf %6, %6 : vector<16x128xf32>
      %cst_10 = arith.constant dense<0.000000e+00> : vector<128xf32>
      %17 = vector.multi_reduction <add>, %16, %cst_10 [0] : vector<16x128xf32> to vector<128xf32>
      %18 = vector.shape_cast %17 : vector<128xf32> to vector<1x128xf32>
      %19 = arith.addf %15, %18 : vector<1x128xf32>
      %c1_11 = arith.constant 1 : index
      %c0_12 = arith.constant 0 : index
      %20 = vector.load %arg6[%c1_11, %c0_12] : memref<2x128xf32, #tpu.memory_space<vmem>>, vector<1x128xf32>
      tpu.vector_store %arg6[%c1_11, %c0_12], %19 {strides = array<i32>} : memref<2x128xf32, #tpu.memory_space<vmem>>, vector<1x128xf32>,
      %c0_i32_13 = arith.constant 0 : i32
      %21 = arith.cmpi eq, %arg1, %c0_i32_13 : i32
      %22 = arith.extui %21 : i1 to i32
      %c0_i32_14 = arith.constant 0 : i32
      %23 = arith.cmpi ne, %22, %c0_i32_14 : i32
      scf.if %23 {
        %c0_15 = arith.constant 0 : index
        %c0_16 = arith.constant 0 : index
        %24 = vector.load %arg6[%c0_15, %c0_16] : memref<2x128xf32, #tpu.memory_space<vmem>>, vector<1x128xf32>
        %cst_17 = arith.constant 6.250000e-02 : f32
        %25 = vector.broadcast %cst_17 : f32 to vector<1x128xf32>
        %26 = arith.mulf %24, %25 : vector<1x128xf32>
        %c1_18 = arith.constant 1 : index
        %c0_19 = arith.constant 0 : index
        %27 = vector.load %arg6[%c1_18, %c0_19] : memref<2x128xf32, #tpu.memory_space<vmem>>, vector<1x128xf32>
        %cst_20 = arith.constant 6.250000e-02 : f32
        %28 = vector.broadcast %cst_20 : f32 to vector<1x128xf32>
        %29 = arith.mulf %27, %28 : vector<1x128xf32>
        %30 = arith.mulf %26, %26 : vector<1x128xf32>
        %31 = arith.subf %29, %30 : vector<1x128xf32>
        %cst_21 = arith.constant 9.99999974E-6 : f32
        %32 = vector.broadcast %cst_21 : f32 to vector<1x128xf32>
        %33 = arith.addf %31, %32 : vector<1x128xf32>
        %34 = math.rsqrt %33 : vector<1x128xf32>
        %c0_22 = arith.constant 0 : index
        %c0_23 = arith.constant 0 : index
        %35 = vector.load %arg3[%c0_22, %c0_23] : memref<1x128xf32, #tpu.memory_space<vmem>>, vector<1x128xf32>
        %36 = arith.mulf %35, %34 : vector<1x128xf32>
        %c0_24 = arith.constant 0 : index
        %c0_25 = arith.constant 0 : index
        %37 = vector.load %arg7[%c0_24, %c0_25] : memref<2x128xf32, #tpu.memory_space<vmem>>, vector<1x128xf32>
        tpu.vector_store %arg7[%c0_24, %c0_25], %36 {strides = array<i32>} : memref<2x128xf32, #tpu.memory_space<vmem>>, vector<1x128xf32>,
        %c0_26 = arith.constant 0 : index
        %c0_27 = arith.constant 0 : index
        %38 = vector.load %arg4[%c0_26, %c0_27] : memref<1x128xf32, #tpu.memory_space<vmem>>, vector<1x128xf32>
        %39 = arith.mulf %26, %36 : vector<1x128xf32>
        %40 = arith.subf %38, %39 : vector<1x128xf32>
        %c1_28 = arith.constant 1 : index
        %c0_29 = arith.constant 0 : index
        %41 = vector.load %arg7[%c1_28, %c0_29] : memref<2x128xf32, #tpu.memory_space<vmem>>, vector<1x128xf32>
        tpu.vector_store %arg7[%c1_28, %c0_29], %40 {strides = array<i32>} : memref<2x128xf32, #tpu.memory_space<vmem>>, vector<1x128xf32>,
      } else {
      }
    } else {
    }
    %c1_i32 = arith.constant 1 : i32
    %3 = arith.cmpi eq, %arg0, %c1_i32 : i32
    %4 = arith.extui %3 : i1 to i32
    %c0_i32_1 = arith.constant 0 : i32
    %5 = arith.cmpi ne, %4, %c0_i32_1 : i32
    scf.if %5 {
      %c0 = arith.constant 0 : index
      %c0_2 = arith.constant 0 : index
      %6 = vector.load %arg2[%c0, %c0_2] : memref<16x128xf32, #tpu.memory_space<vmem>>, vector<16x128xf32>
      %c0_3 = arith.constant 0 : index
      %c0_4 = arith.constant 0 : index
      %7 = vector.load %arg7[%c0_3, %c0_4] : memref<2x128xf32, #tpu.memory_space<vmem>>, vector<1x128xf32>
      %8 = vector.broadcast %7 : vector<1x128xf32> to vector<16x128xf32>
      %9 = arith.mulf %6, %8 : vector<16x128xf32>
      %c1 = arith.constant 1 : index
      %c0_5 = arith.constant 0 : index
      %10 = vector.load %arg7[%c1, %c0_5] : memref<2x128xf32, #tpu.memory_space<vmem>>, vector<1x128xf32>
      %11 = vector.broadcast %10 : vector<1x128xf32> to vector<16x128xf32>
      %12 = arith.addf %9, %11 : vector<16x128xf32>
      %c0_6 = arith.constant 0 : index
      %c0_7 = arith.constant 0 : index
      %13 = vector.load %arg5[%c0_6, %c0_7] : memref<16x128xf32, #tpu.memory_space<vmem>>, vector<16x128xf32>
      tpu.vector_store %arg5[%c0_6, %c0_7], %12 {strides = array<i32>} : memref<16x128xf32, #tpu.memory_space<vmem>>, vector<16x128xf32>,
    } else {
    }
    return
  }
  func.func @transform_0(%arg0: i32, %arg1: i32) -> (i32, i32) {
    %c0_i32 = arith.constant 0 : i32
    %c0_i32_0 = arith.constant 0 : i32
    return %arg1, %c0_i32 : i32, i32
  }
  func.func @transform_1(%arg0: i32, %arg1: i32) -> (i32, i32) {
    %c0_i32 = arith.constant 0 : i32
    %c0_i32_0 = arith.constant 0 : i32
    %c0_i32_1 = arith.constant 0 : i32
    return %c0_i32, %c0_i32_0 : i32, i32
  }
  func.func @transform_2(%arg0: i32, %arg1: i32) -> (i32, i32) {
    %c0_i32 = arith.constant 0 : i32
    %c0_i32_0 = arith.constant 0 : i32
    %c0_i32_1 = arith.constant 0 : i32
    return %c0_i32, %c0_i32_0 : i32, i32
  }
  func.func @transform_3(%arg0: i32, %arg1: i32) -> (i32, i32) {
    %c0_i32 = arith.constant 0 : i32
    %c0_i32_0 = arith.constant 0 : i32
    return %arg1, %c0_i32 : i32, i32
  }
}

</mosaic_0001>

<llo_original>
// kernel: tpu_custom_call.1
$region0: #{tpu_custom_call.1}
  #allocation0 [shape = 'u32[]', space=smem, size = 0x4, offset = 0x4, fixed_abs, tag = 'smem constant byte address 0x4 - core index']
  #allocation1 [shape = 'u32[144,128]{1,0:T(1,128)}', space=vmem, size = 0x12000, scoped, tag = 'internal scratch']
  #allocation2 [shape = 'f32[2,128]{1,0:T(2,128)}', space=vmem, size = 0x400, scoped, tag = 'scratch operand']
  #allocation3 [shape = 'f32[2,128]{1,0:T(2,128)}', space=vmem, size = 0x400, scoped, tag = 'scratch operand']
  %s0 = inlined_call_operand.hbm [shape: f32[16,128], index: 0, kind: input, shape index: {}]
  %s1 = inlined_call_operand.vmem [shape: f32[1,128], index: 1, kind: input, shape index: {}]
  %s2 = inlined_call_operand.vmem [shape: f32[1,128], index: 2, kind: input, shape index: {}]
  %s3 = inlined_call_operand.hbm [shape: f32[16,128], index: 3, kind: output, shape index: {}]
  %s4 = sld [smem:[#allocation0]]
  $region65: #{tpu_custom_call.1} parent=0
    _
  %s6 = ssub.s32 1, %s4
  %s7 = scalar_select 0, %s6, %s4
  $region1: #{tpu_custom_call.1} parent=0
    #allocation4 [shape = 'u8[8192]{0}', space=vmem, size = 0x2000, scoped, tag = 'input window, operand 0, single buffered']
    #allocation5 [shape = 's32[2]{0}', space=sflag, size = 0x8, scoped, tag = 'scoped memory for tpu_custom_call.1']
    #allocation6 [shape = 's32[2]{0}', space=sflag, size = 0x8, scoped, tag = 'scoped memory for tpu_custom_call.1']
    #allocation7 [shape = 'u8[8192]{0}', space=vmem, size = 0x2000, scoped, tag = 'output window, operand 0, single buffered']
    %8 = vsyncpa [#allocation5], 0
    %9 = vsyncpa [#allocation6], 0
    loop: start=0, step=1, limit=4
    $region2: #{tpu_custom_call.1} parent=1 // loop_pre_header
      _
    $region3: #{tpu_custom_call.1} parent=1 // loop_header
      %s11 = sphi 0, %s15
      %p12 = scmp.ge.s32.totalorder %s11, 4
      %s18 = sphi 0, %s30
      %s19 = sphi 0, %s26
      %s20 = sphi 0, %s18
      %s21 = sphi 0, %s19
      %s22 = sphi 0, %s20
      %s23 = sphi 0, %s21
      %s33 = sphi 0, %s35
      %s36 = sphi 0, %s33
      %s37 = sphi 0, %s36
      %s53 = sphi 0, %s37
      %s57 = sphi 0, %s57
      %s59 = sphi 0, %s57
      %s60 = sphi 0, %s59
      %s74 = sphi 0, %s60
      %s78 = sphi 0, %s78
      %s80 = sphi 0, %s78
      %s81 = sphi 0, %s80
      %s95 = sphi 0, %s81
      %s101 = sphi 0, %s103
      %s104 = sphi 0, %s101
      %s105 = sphi 0, %s104
      %s121 = sphi 0, %s105
    $region4: #{tpu_custom_call.1} parent=1 // loop_header_branch
      %14 = sbr.rel (%p12) target = $region8
    $region5: #{tpu_custom_call.1} parent=1 // loop_body
      %s16 = ssub.s32 %s11, 1
      %s17 = ssub.s32 %s11, 2
      %s24 = sadd.s32 1, %s19
      %p25 = scmp.ge.s32.totalorder %s24, 1
      %s26 = scalar_select %p25, 0, %s24
      %s27 = sadd.s32 1, %s18
      %s28 = scalar_select %p25, %s27, %s18
      %p29 = scmp.ge.s32.totalorder %s28, 2
      %s30 = scalar_select %p29, 0, %s28
      %s31 = ssub.s32 %s19, %s26
      %p32 = scmp.eq.s32.totalorder %s31, 0
      %s34 = sadd.s32 %s33, 1
      %s35 = scalar_select %p32, %s33, %s34
      %p38 = pneg %p32
      %p39 = scmp.eq.s32.totalorder %s11, 1
      %p40 = por %p38, %p39
      %p41 = scmp.ne.s32.totalorder %s33, %s36
      %p42 = scmp.eq.s32.totalorder %s11, 0
      %p43 = por %p41, %p42
      %p44 = scmp.ne.s32.totalorder %s33, %s36
      %p45 = scmp.eq.s32.totalorder %s16, 1
      %p46 = por %p44, %p45
      %p47 = scmp.ne.s32.totalorder %s36, %s37
      %p48 = scmp.eq.s32.totalorder %s16, 0
      %p49 = por %p47, %p48
      %p50 = scmp.ne.s32.totalorder %s36, %s37
      %p51 = scmp.eq.s32.totalorder %s17, 1
      %p52 = por %p50, %p51
      %p54 = scmp.ne.s32.totalorder %s37, %s53
      %p55 = scmp.eq.s32.totalorder %s17, 0
      %p56 = por %p54, %p55
      %s58 = sadd.s32 %s57, 1
      %p61 = scmp.eq.s32.totalorder %s11, 1
      %p62 = scmp.ne.s32.totalorder %s57, %s59
      %p63 = scmp.eq.s32.totalorder %s11, 0
      %p64 = por %p62, %p63
      %p65 = scmp.ne.s32.totalorder %s57, %s59
      %p66 = scmp.eq.s32.totalorder %s16, 1
      %p67 = por %p65, %p66
      %p68 = scmp.ne.s32.totalorder %s59, %s60
      %p69 = scmp.eq.s32.totalorder %s16, 0
      %p70 = por %p68, %p69
      %p71 = scmp.ne.s32.totalorder %s59, %s60
      %p72 = scmp.eq.s32.totalorder %s17, 1
      %p73 = por %p71, %p72
      %p75 = scmp.ne.s32.totalorder %s60, %s74
      %p76 = scmp.eq.s32.totalorder %s17, 0
      %p77 = por %p75, %p76
      %s79 = sadd.s32 %s78, 1
      %p82 = scmp.eq.s32.totalorder %s11, 1
      %p83 = scmp.ne.s32.totalorder %s78, %s80
      %p84 = scmp.eq.s32.totalorder %s11, 0
      %p85 = por %p83, %p84
      %p86 = scmp.ne.s32.totalorder %s78, %s80
      %p87 = scmp.eq.s32.totalorder %s16, 1
      %p88 = por %p86, %p87
      %p89 = scmp.ne.s32.totalorder %s80, %s81
      %p90 = scmp.eq.s32.totalorder %s16, 0
      %p91 = por %p89, %p90
      %p92 = scmp.ne.s32.totalorder %s80, %s81
      %p93 = scmp.eq.s32.totalorder %s17, 1
      %p94 = por %p92, %p93
      %p96 = scmp.ne.s32.totalorder %s81, %s95
      %p97 = scmp.eq.s32.totalorder %s17, 0
      %p98 = por %p96, %p97
      %s99 = ssub.s32 %s19, %s26
      %p100 = scmp.eq.s32.totalorder %s99, 0
      %s102 = sadd.s32 %s101, 1
      %s103 = scalar_select %p100, %s101, %s102
      %p106 = pneg %p100
      %p107 = scmp.eq.s32.totalorder %s11, 1
      %p108 = por %p106, %p107
      %p109 = scmp.ne.s32.totalorder %s101, %s104
      %p110 = scmp.eq.s32.totalorder %s11, 0
      %p111 = por %p109, %p110
      %p112 = scmp.ne.s32.totalorder %s101, %s104
      %p113 = scmp.eq.s32.totalorder %s16, 1
      %p114 = por %p112, %p113
      %p115 = scmp.ne.s32.totalorder %s104, %s105
      %p116 = scmp.eq.s32.totalorder %s16, 0
      %p117 = por %p115, %p116
      %p118 = scmp.ne.s32.totalorder %s104, %s105
      %p119 = scmp.eq.s32.totalorder %s17, 1
      %p120 = por %p118, %p119
      %p122 = scmp.ne.s32.totalorder %s105, %s121
      %p123 = scmp.eq.s32.totalorder %s17, 0
      %p124 = por %p122, %p123
      %p125 = scmp.le.s32.totalorder 1, %s11
      %p126 = scmp.lt.s32.totalorder %s11, 3
      %p127 = pnand %p125, %p126
      %p128 = pneg %p127
      // Predicated region
      $region9: #{tpu_custom_call.1} parent=5 // pred_check
        _
      $region10: #{tpu_custom_call.1} parent=5 // pred_check_branch
        %130 = sbr.rel (%p127) target = $region12
      $region11: #{tpu_custom_call.1} parent=5 // pred_region
        %s131 = ssub.s32 %s11, 1
        // Predicated region
        $region13: #{tpu_custom_call.1} parent=11 // pred_check
          %p132 = pneg %p49
        $region14: #{tpu_custom_call.1} parent=11 // pred_check_branch
          %134 = sbr.rel (%p132) target = $region16
        $region15: #{tpu_custom_call.1} parent=11 // pred_region
          %s135 = smul.u32 2, %s21
          %s137 = ssub.s32 256, 256
          %138 = vsyncadd [#allocation5], %s137
          %s139 = smul.addr %s135, 128
          %s140 = scalar_lea.hbm %s0, %s139
          %s141 = sshll.u32 [#allocation4], 4
          %s142 = int_to_ptr.vmem [resolvable:$true] %s141
          %147 = dma.hbm_to_vmem [thread:$0]  %s140, 256, %s142, [#allocation5], 128, 128, 8
        $region16: #{tpu_custom_call.1} parent=11 // pred_fallthru
          _
        // Predicated region
        $region17: #{tpu_custom_call.1} parent=11 // pred_check
          %p148 = pneg %p70
        $region18: #{tpu_custom_call.1} parent=11 // pred_check_branch
          %150 = sbr.rel (%p148) target = $region20
        $region19: #{tpu_custom_call.1} parent=11 // pred_region
          _
        $region20: #{tpu_custom_call.1} parent=11 // pred_fallthru
          _
        // Predicated region
        $region21: #{tpu_custom_call.1} parent=11 // pred_check
          %p151 = pneg %p91
        $region22: #{tpu_custom_call.1} parent=11 // pred_check_branch
          %153 = sbr.rel (%p151) target = $region24
        $region23: #{tpu_custom_call.1} parent=11 // pred_region
          _
        $region24: #{tpu_custom_call.1} parent=11 // pred_fallthru
          _
      $region12: #{tpu_custom_call.1} parent=5 // pred_fallthru
        _
      %p154 = scmp.lt.s32.totalorder %s11, 2
      // Predicated region
      $region25: #{tpu_custom_call.1} parent=5 // pred_check
        %p155 = pneg %p154
      $region26: #{tpu_custom_call.1} parent=5 // pred_check_branch
        %157 = sbr.rel (%p155) target = $region28
      $region27: #{tpu_custom_call.1} parent=5 // pred_region
        _
      $region28: #{tpu_custom_call.1} parent=5 // pred_fallthru
        _
      %p158 = scmp.le.s32.totalorder 1, %s11
      %p159 = scmp.lt.s32.totalorder %s11, 3
      %p160 = pnand %p158, %p159
      %p161 = pneg %p160
      // Predicated region
      $region29: #{tpu_custom_call.1} parent=5 // pred_check
        _
      $region30: #{tpu_custom_call.1} parent=5 // pred_check_branch
        %163 = sbr.rel (%p160) target = $region32
      $region31: #{tpu_custom_call.1} parent=5 // pred_region
        %s164 = ssub.s32 %s11, 1
        // Predicated region
        $region33: #{tpu_custom_call.1} parent=31 // pred_check
          %p165 = pneg %p49
        $region34: #{tpu_custom_call.1} parent=31 // pred_check_branch
          %167 = sbr.rel (%p165) target = $region36
        $region35: #{tpu_custom_call.1} parent=31 // pred_region
          %168 = dma.done [#allocation5], 256
        $region36: #{tpu_custom_call.1} parent=31 // pred_fallthru
          _
        %p169 = pneg %p49
        %p170 = pneg %p46
        %p171 = pneg %p70
        %p172 = pneg %p67
        %p173 = pneg %p91
        %p174 = pneg %p88
        %p175 = pneg %p117
        %p176 = pneg %p114
        %s177 = smul.u32 2, %s21
        %s178 = smul.u32 2, %s21
        %p179 = scmp.eq.s32.totalorder %s20, 0
        // Predicated region
        $region37: #{tpu_custom_call.1} parent=31 // pred_check
          %p180 = pneg %p179
        $region38: #{tpu_custom_call.1} parent=31 // pred_check_branch
          %182 = sbr.rel (%p180) target = $region40
        $region39: #{tpu_custom_call.1} parent=31 // pred_region
          %v183 = vld [vmem:[#allocation4] sm:$0xff]
          %v184 = vld [vmem:[#allocation4 + $0x8] sm:$0xff]
          %p185 = scmp.eq.s32.totalorder %s21, 0
          // Predicated region
          $region41: #{tpu_custom_call.1} parent=39 // pred_check
            %p186 = pneg %p185
          $region42: #{tpu_custom_call.1} parent=39 // pred_check_branch
            %188 = sbr.rel (%p186) target = $region44
          $region43: #{tpu_custom_call.1} parent=39 // pred_region
            %189 = vst [vmem:[#allocation2] sm:$0x3] 0.0
          $region44: #{tpu_custom_call.1} parent=39 // pred_fallthru
            _
          %v190 = vld [vmem:[#allocation2] sm:$0x1]
          %v191 = vadd.f32 %v183, %v184
          %v192 = vrot.slane %v191, 4
          %v193 = vadd.f32 %v191, %v192
          %v194 = vrot.slane %v193, 2
          %v195 = vadd.f32 %v193, %v194
          %v196 = vrot.slane %v195, 1
          %v197 = vadd.f32 %v195, %v196
          %v198 = vadd.f32 %v190, %v197
          %199 = vst [vmem:[#allocation2] sm:$0x1] %v198
          %v200 = vld [vmem:[#allocation2 + $0x1] sm:$0x1]
          %v201 = vmul.f32 %v183, %v183
          %v202 = vmul.f32 %v184, %v184
          %v203 = vadd.f32 %v201, %v202
          %v204 = vrot.slane %v203, 4
          %v205 = vadd.f32 %v203, %v204
          %v206 = vrot.slane %v205, 2
          %v207 = vadd.f32 %v205, %v206
          %v208 = vrot.slane %v207, 1
          %v209 = vadd.f32 %v207, %v208
          %v210 = vadd.f32 %v200, %v209
          %211 = vst [vmem:[#allocation2 + $0x1] sm:$0x1] %v210
          // Predicated region
          $region45: #{tpu_custom_call.1} parent=39 // pred_check
            %p212 = pneg %p185
          $region46: #{tpu_custom_call.1} parent=39 // pred_check_branch
            %214 = sbr.rel (%p212) target = $region48
          $region47: #{tpu_custom_call.1} parent=39 // pred_region
            %v215 = vld [vmem:[#allocation2] sm:$0x1]
            %v216 = vmul.f32 %v215, 0.0625
            %v217 = vld [vmem:[#allocation2 + $0x1] sm:$0x1]
            %v218 = vmul.f32 %v217, 0.0625
            %v219 = vmul.f32 %v216, %v216
            %v220 = vsub.f32 %v218, %v219
            %v221 = vadd.f32 %v220, 1e-05
            %v222 = vrsqrt.pop %v221
            %v223 = vld [vmem:[%s1] sm:$0x1]
            %v224 = vmul.f32 %v223, %v222
            %225 = vst [vmem:[#allocation3] sm:$0x1] %v224
            %v226 = vld [vmem:[%s2] sm:$0x1]
            %v227 = vmul.f32 %v216, %v224
            %v228 = vsub.f32 %v226, %v227
            %229 = vst [vmem:[#allocation3 + $0x1] sm:$0x1] %v228
          $region48: #{tpu_custom_call.1} parent=39 // pred_fallthru
            _
        $region40: #{tpu_custom_call.1} parent=31 // pred_fallthru
          _
        %p230 = scmp.eq.s32.totalorder %s20, 1
        // Predicated region
        $region49: #{tpu_custom_call.1} parent=31 // pred_check
          %p231 = pneg %p230
        $region50: #{tpu_custom_call.1} parent=31 // pred_check_branch
          %233 = sbr.rel (%p231) target = $region52
        $region51: #{tpu_custom_call.1} parent=31 // pred_region
          %v234 = vld [vmem:[#allocation4] sm:$0xff]
          %v235 = vld [vmem:[#allocation4 + $0x8] sm:$0xff]
          %v236 = vld [vmem:[#allocation3] sm:$0x1]
          %v237 = vlaneseq
          %v238 = vshrl.u32 %v237, 7
          %v239 = vsub.s32 0, %v238
          %v240 = vrot.slane %v236, %v239
          %v241 = vmul.f32 %v234, %v240
          %v242 = vmul.f32 %v235, %v240
          %v243 = vld [vmem:[#allocation3 + $0x1] sm:$0x1]
          %v244 = vlaneseq
          %v245 = vshrl.u32 %v244, 7
          %v246 = vsub.s32 0, %v245
          %v247 = vrot.slane %v243, %v246
          %v248 = vadd.f32 %v241, %v247
          %v249 = vadd.f32 %v242, %v247
          %250 = vst [vmem:[#allocation7] sm:$0xff] %v248
          %251 = vst [vmem:[#allocation7 + $0x8] sm:$0xff] %v249
        $region52: #{tpu_custom_call.1} parent=31 // pred_fallthru
          _
        // Predicated region
        $region53: #{tpu_custom_call.1} parent=31 // pred_check
          %p252 = pneg %p114
        $region54: #{tpu_custom_call.1} parent=31 // pred_check_branch
          %254 = sbr.rel (%p252) target = $region56
        $region55: #{tpu_custom_call.1} parent=31 // pred_region
          %s255 = smul.u32 2, %s21
          %s257 = ssub.s32 256, 256
          %258 = vsyncadd [#allocation6], %s257
          %s259 = smul.addr %s255, 128
          %s260 = scalar_lea.hbm %s3, %s259
          %s261 = sshll.u32 [#allocation7], 4
          %s262 = int_to_ptr.vmem [resolvable:$true] %s261
          %267 = dma.vmem_to_hbm [thread:$0]  %s262, 256, %s260, [#allocation6], 128, 128, 8
        $region56: #{tpu_custom_call.1} parent=31 // pred_fallthru
          _
        // Predicated region
        $region57: #{tpu_custom_call.1} parent=31 // pred_check
          %p268 = pneg %p114
        $region58: #{tpu_custom_call.1} parent=31 // pred_check_branch
          %270 = sbr.rel (%p268) target = $region60
        $region59: #{tpu_custom_call.1} parent=31 // pred_region
          %271 = dma.done [#allocation6], 256
        $region60: #{tpu_custom_call.1} parent=31 // pred_fallthru
          _
      $region32: #{tpu_custom_call.1} parent=5 // pred_fallthru
        _
      %p272 = scmp.le.s32.totalorder 2, %s11
      // Predicated region
      $region61: #{tpu_custom_call.1} parent=5 // pred_check
        %p273 = pneg %p272
      $region62: #{tpu_custom_call.1} parent=5 // pred_check_branch
        %275 = sbr.rel (%p273) target = $region64
      $region63: #{tpu_custom_call.1} parent=5 // pred_region
        %s276 = ssub.s32 %s11, 2
      $region64: #{tpu_custom_call.1} parent=5 // pred_fallthru
        _
    $region6: #{tpu_custom_call.1} parent=1 // loop_footer
      %s15 = sadd.s32 1, %s11
    $region7: #{tpu_custom_call.1} parent=1 // loop_footer_branch
      %10 = sbr.rel target = $region3
    $region8: #{tpu_custom_call.1} parent=1 // loop_exit
      _
    %277 = vsyncpa [#allocation5], 1
    %s278 = scalar_lea.sflag [#allocation5], 1
    %279 = vsyncpa %s278, 1
    %280 = vsyncpa [#allocation6], 1
    %s281 = scalar_lea.sflag [#allocation6], 1
    %282 = vsyncpa %s281, 1

</llo_original>
